<compile_context>
chip_gen: v5e
topology: v5e:2x2
jax: 0.10.0
libtpu: 0.0.40
codegen_flags: <defaults>
</compile_context>

<pallas_src>
import functools

import jax
import jax.numpy as jnp
from jax import lax
from jax.experimental import pallas as pl
from jax.experimental.pallas import tpu as pltpu


def _round_up(v, m):
    return ((v + m - 1) // m) * m


def _cdiv(a, b):
    return (a + b - 1) // b


@functools.lru_cache(maxsize=1)
def _vmem_capacity_bytes():
    try:
        return int(pltpu.get_tpu_info().vmem_capacity_bytes)
    except Exception:
        return 64 * 1024 * 1024  # conservative (v7x per-TC VMEM)


# ----------------------------- Pallas kernels --------------------------------
def _conv_tanh_kernel_direct(col_ref, w_ref, b_ref, o_ref, *, cdt):
    # col_ref: (K, TS)   w_ref: (TCo, K) [compute dtype]   b_ref: (TCo, 1) f32
    # o_ref:   (TCo, TS)
    acc = jnp.dot(w_ref[...], col_ref[...].astype(cdt),
                  preferred_element_type=jnp.float32)
    o_ref[...] = jnp.tanh(acc + b_ref[...]).astype(o_ref.dtype)


def _conv_tanh_kernel_acc(col_ref, w_ref, b_ref, o_ref, acc_ref, *, cdt):
    # Same as above but with a K-tiled reduction and a resident f32 accumulator.
    k = pl.program_id(3)

    @pl.when(k == 0)
    def _():
        acc_ref[...] = jnp.zeros_like(acc_ref)

    acc_ref[...] += jnp.dot(w_ref[...], col_ref[...].astype(cdt),
                            preferred_element_type=jnp.float32)

    @pl.when(k == pl.num_programs(3) - 1)
    def _():
        o_ref[...] = jnp.tanh(acc_ref[...] + b_ref[...]).astype(o_ref.dtype)


# ----------------------------- tiling heuristics ------------------------------
def _block_vmem_bytes(tile_co, tile_s, tk, use_acc, col_item, w_item, out_item):
    return (2 * tk * tile_s * col_item          # col tile (double-buffered)
            + 2 * tile_co * tk * w_item         # weight tile
            + 2 * tile_co * 4                   # f32 bias
            + 2 * tile_co * tile_s * out_item   # output tile
            + (tile_co * tile_s * 4 if use_acc else 0))   # f32 accumulator


def _pick_tile_s(S, tile_s_max):
    # Full-extent lane block when it fits (always a legal block shape, no padding,
    # no partial blocks); otherwise the 128-multiple tile with minimal waste.
    if S <= tile_s_max:
        return S
    best_c, best_waste = tile_s_max, (-S) % tile_s_max
    c = tile_s_max - 128
    while c >= 256:
        w = (-S) % c
        if w < best_waste:
            best_c, best_waste = c, w
        c -= 128
    return best_c


def _conv_tanh_matmul(col, w2d, b2d, out_dtype, cdt):
    """col: (N, K, S), w2d: (Cout, K) [cdt], b2d: (Cout, 1) f32 -> (N, Cout, S)."""
    N, K, S = col.shape
    Cout = w2d.shape[0]
    col_item = col.dtype.itemsize
    w_item = w2d.dtype.itemsize
    out_item = jnp.dtype(out_dtype).itemsize

    vmem_cap = _vmem_capacity_bytes()
    tile_s_max = 1024 if vmem_cap >= (100 << 20) else 512   # v5e/v6e vs v7x
    budget = int(0.6 * vmem_cap)                             # block working-set budget

    tile_s = _pick_tile_s(S, tile_s_max)
    tile_co = Cout if Cout <= 512 else 256                   # Cout grid axis when large
    tk, use_acc = K, False                                   # prefer full-K (no W re-stream)

    # Budget-driven fallbacks (rare for typical conv shapes).
    if _block_vmem_bytes(tile_co, tile_s, tk, use_acc, col_item, w_item, out_item) > budget \
            and tile_co > 256:
        tile_co = 256
    if _block_vmem_bytes(tile_co, tile_s, tk, use_acc, col_item, w_item, out_item) > budget \
            and K > 1024:
        tk, use_acc = 512, True                              # 512: multiple of 256 (MXU) & 8
    while _block_vmem_bytes(tile_co, tile_s, tk, use_acc, col_item, w_item, out_item) > budget \
            and tile_s > 256:
        tile_s = max(256, (tile_s // 2 // 128) * 128)
    if _block_vmem_bytes(tile_co, tile_s, tk, use_acc, col_item, w_item, out_item) > budget \
            and tile_co > 128:
        tile_co = 128

    # v7x megacore: make sure both TensorCores get at least one parallel block.
    n_co, n_s = _cdiv(Cout, tile_co), _cdiv(S, tile_s)
    if N * n_co * n_s < 2 and S >= 256:
        tile_s = _round_up(_cdiv(S, 2), 128)
        n_s = _cdiv(S, tile_s)

    # K padding only when the reduction axis is actually tiled.
    if use_acc:
        K_pad = _round_up(K, tk)
        if K_pad != K:
            col = jnp.pad(col, ((0, 0), (0, K_pad - K), (0, 0)))
            w2d = jnp.pad(w2d, ((0, 0), (0, K_pad - K)))
    else:
        K_pad = K
    nkt = K_pad // tk

    vmem_need = _block_vmem_bytes(tile_co, tile_s, tk, use_acc, col_item, w_item, out_item)
    vmem_limit = int(min(0.65 * vmem_cap, max(16 << 20, 3 * vmem_need // 2 + (2 << 20))))
    vmem_limit = max(vmem_limit, vmem_need + (1 << 20))

    # Advisory cost hint (counts weight re-streaming when K is tiled).
    w_factor = N * (n_s if nkt > 1 else 1)
    cost = pl.CostEstimate(
        flops=2 * N * Cout * K * S,
        transcendentals=N * Cout * S,
        bytes_accessed=int(col.size * col_item + w2d.size * w_item * w_factor
                           + Cout * 4 + N * Cout * S * out_item),
    )

    if nkt == 1:
        # Common case: full K resident, no accumulator scratch, fused epilogue.
        grid = (N, n_co, n_s)
        in_specs = [
            pl.BlockSpec((None, K_pad, tile_s), lambda n, co, s: (n, 0, s)),
            pl.BlockSpec((tile_co, K_pad), lambda n, co, s: (co, 0)),
            pl.BlockSpec((tile_co, 1), lambda n, co, s: (co, 0)),
        ]
        out_specs = pl.BlockSpec((None, tile_co, tile_s), lambda n, co, s: (n, co, s))
        scratch = []
        sem = ("parallel", "parallel", "parallel")
        kernel = functools.partial(_conv_tanh_kernel_direct, cdt=cdt)
    else:
        grid = (N, n_co, n_s, nkt)
        in_specs = [
            pl.BlockSpec((None, tk, tile_s), lambda n, co, s, k: (n, k, s)),
            pl.BlockSpec((tile_co, tk), lambda n, co, s, k: (co, k)),
            pl.BlockSpec((tile_co, 1), lambda n, co, s, k: (co, 0)),
        ]
        out_specs = pl.BlockSpec((None, tile_co, tile_s), lambda n, co, s, k: (n, co, s))
        scratch = [pltpu.VMEM((tile_co, tile_s), jnp.float32)]
        sem = ("parallel", "parallel", "parallel", "arbitrary")
        kernel = functools.partial(_conv_tanh_kernel_acc, cdt=cdt)

    out = pl.pallas_call(
        kernel,
        out_shape=jax.ShapeDtypeStruct((N, Cout, S), out_dtype),
        grid_spec=pltpu.PrefetchScalarGridSpec(
            num_scalar_prefetch=0,
            grid=grid,
            in_specs=in_specs,
            out_specs=out_specs,
            scratch_shapes=scratch,
        ),
        compiler_params=pltpu.CompilerParams(
            dimension_semantics=sem,
            vmem_limit_bytes=vmem_limit,
        ),
        cost_estimate=cost,
    )(col, w2d, b2d)
    return out


# ------------------------------- glue (JAX) -----------------------------------
def _im2col_nchw_chw(x, kh, kw, stride, padding):
    """x: (N, C, H, W) -> col: (N, C*kh*kw, Ho*Wo), matching PyTorch weight
    flattening order (channel-major, then kh, then kw)."""
    N, C, H, W = x.shape
    Ho = (H + 2 * padding - kh) // stride + 1
    Wo = (W + 2 * padding - kw) // stride + 1

    # Fast path: 1x1 / stride 1 / no pad -> pure (free) reshape of x.
    if kh == 1 and kw == 1 and stride == 1 and padding == 0:
        return x.reshape(N, C, H * W), Ho, Wo

    xp = jnp.pad(x, ((0, 0), (0, 0), (padding, padding), (padding, padding)))
    patches = []
    for i in range(kh):
        for j in range(kw):
            patches.append(
                xp[:, :, i:i + stride * Ho:stride, j:j + stride * Wo:stride])
    col = jnp.stack(patches, axis=2)                 # (N, C, kh*kw, Ho, Wo)
    col = col.reshape(N, C * kh * kw, Ho * Wo)       # channel-major patch rows
    return col, Ho, Wo


@functools.partial(jax.jit, static_argnames=("stride", "padding", "compute_dtype"))
def conv_tanh(x, weight, bias, *, stride=1, padding=0, compute_dtype=None):
    """ConvTanh forward.

    x:      (N, Cin, H, W)   -- NCHW, like the PyTorch module
    weight: (Cout, Cin, kh, kw)
    bias:   (Cout,)
    compute_dtype: optional matmul input dtype (e.g. jnp.bfloat16 — useful on
                   v5e/v6e/v7x alike); accumulation, bias and tanh stay f32.
    returns (N, Cout, Ho, Wo)
    """
    N, Cin, H, W = x.shape
    Cout, _, kh, kw = weight.shape
    out_dtype = x.dtype
    cdt = jnp.dtype(compute_dtype) if compute_dtype is not None else jnp.dtype(x.dtype)

    fast_1x1 = (kh == 1 and kw == 1 and stride == 1 and padding == 0)
    col, Ho, Wo = _im2col_nchw_chw(x, kh, kw, stride, padding)   # (N, K, Ho*Wo)
    if not fast_1x1:
        # im2col materializes col anyway: fuse the compute-dtype cast into the
        # gather (halves col HBM bytes for bf16).  On the 1x1 fast path col is a
        # zero-copy reshape of x; keep its dtype and cast in-kernel instead.
        col = col.astype(cdt)

    w2d = weight.reshape(Cout, Cin * kh * kw).astype(cdt)        # (Cout, K)
    b2d = bias.reshape(Cout, 1).astype(jnp.float32)              # f32 epilogue

    out3d = _conv_tanh_matmul(col, w2d, b2d, out_dtype, cdt)     # (N, Cout, Ho*Wo)
    return out3d.reshape(N, Cout, Ho, Wo)                        # already NCHW


def init_conv_params(key, in_channels, out_channels, kernel_size):
    """Deterministic Conv2d-style init (uniform in +-1/sqrt(fan_in))."""
    kw_, kb = jax.random.split(key)
    fan_in = in_channels * kernel_size * kernel_size
    bound = 1.0 / jnp.sqrt(jnp.float32(fan_in))
    weight = jax.random.uniform(
        kw_, (out_channels, in_channels, kernel_size, kernel_size),
        dtype=jnp.float32, minval=-bound, maxval=bound)
    bias = jax.random.uniform(
        kb, (out_channels,), dtype=jnp.float32, minval=-bound, maxval=bound)
    return weight, bias


if __name__ == "__main__":
    key = jax.random.PRNGKey(0)
    kx, kp, kx4, kp4 = jax.random.split(key, 4)

    N, Cin, H, W = 2, 4, 16, 16
    Cout = 8
    x = jax.random.normal(kx, (N, Cin, H, W), dtype=jnp.float32)

    # --- case 1: module defaults (kernel_size=1, stride=1, padding=0), f32 ---
    w1, b1 = init_conv_params(kp, Cin, Cout, 1)
    out1 = jax.block_until_ready(conv_tanh(x, w1, b1, stride=1, padding=0))
    ref1 = jnp.tanh(
        lax.conv_general_dilated(
            x, w1, window_strides=(1, 1), padding="VALID",
            dimension_numbers=("NCHW", "OIHW", "NCHW"))
        + b1.reshape(1, Cout, 1, 1))
    assert out1.shape == (N, Cout, H, W)
    assert jnp.max(jnp.abs(out1 - ref1)) < 1e-5

    # --- case 2: im2col path (kernel_size=3, stride=2, padding=1), f32 -------
    w3, b3 = init_conv_params(kp, Cin, Cout, 3)
    out3 = jax.block_until_ready(conv_tanh(x, w3, b3, stride=2, padding=1))
    ref3 = jnp.tanh(
        lax.conv_general_dilated(
            x, w3, window_strides=(2, 2), padding=((1, 1), (1, 1)),
            dimension_numbers=("NCHW", "OIHW", "NCHW"))
        + b3.reshape(1, Cout, 1, 1))
    assert out3.shape == (N, Cout, 8, 8)
    assert jnp.max(jnp.abs(out3 - ref3)) < 1e-5

    # --- case 3: bf16 matmul inputs (MXU fast path), f32 accumulate ----------
    out1_bf16 = jax.block_until_ready(
        conv_tanh(x, w1, b1, stride=1, padding=0, compute_dtype=jnp.bfloat16))
    assert out1_bf16.shape == (N, Cout, H, W)
    assert jnp.max(jnp.abs(out1_bf16 - ref1)) < 5e-2

    # --- case 4: non-aligned S (10x20 -> 200 lanes) and Cout=5, 3x3/pad 1 -----
    x4 = jax.random.normal(kx4, (2, 3, 10, 20), dtype=jnp.float32)
    w4, b4 = init_conv_params(kp4, 3, 5, 3)
    out4 = jax.block_until_ready(conv_tanh(x4, w4, b4, stride=1, padding=1))
    ref4 = jnp.tanh(
        lax.conv_general_dilated(
            x4, w4, window_strides=(1, 1), padding=((1, 1), (1, 1)),
            dimension_numbers=("NCHW", "OIHW", "NCHW"))
        + b4.reshape(1, 5, 1, 1))
    assert out4.shape == (2, 5, 10, 20)
    assert jnp.max(jnp.abs(out4 - ref4)) < 1e-5

    print("KERNEL_OK")
</pallas_src>

<mosaic_0001>
module attributes {stable_mosaic.version = 11 : i64} {
  func.func @_conv_tanh_kernel_direct(%arg0: i32, %arg1: i32, %arg2: i32, %arg3: memref<1x4x256xf32, #tpu.memory_space<vmem>>, %arg4: memref<8x4xf32, #tpu.memory_space<vmem>>, %arg5: memref<8x1xf32, #tpu.memory_space<vmem>>, %arg6: memref<1x8x256xf32, #tpu.memory_space<vmem>>) attributes {dimension_semantics = [#tpu.dimension_semantics<parallel>, #tpu.dimension_semantics<parallel>, #tpu.dimension_semantics<parallel>], iteration_bounds = array<i64: 2, 1, 1>, scalar_prefetch = 0 : i64, scratch_operands = 0 : i64, tpu.core_type = #tpu.core_type<tc>, window_params = [{transform_indices = @transform_0, window_bounds = array<i64: 1, 4, 256>}, {transform_indices = @transform_1, window_bounds = array<i64: 8, 4>}, {transform_indices = @transform_2, window_bounds = array<i64: 8, 1>}, {transform_indices = @transform_3, window_bounds = array<i64: 1, 8, 256>}]} {
    %c0 = arith.constant 0 : index
    %c0_0 = arith.constant 0 : index
    %0 = vector.load %arg4[%c0, %c0_0] : memref<8x4xf32, #tpu.memory_space<vmem>>, vector<8x4xf32>
    %c0_1 = arith.constant 0 : index
    %c0_2 = arith.constant 0 : index
    %c0_3 = arith.constant 0 : index
    %1 = vector.load %arg3[%c0_1, %c0_2, %c0_3] : memref<1x4x256xf32, #tpu.memory_space<vmem>>, vector<1x4x256xf32>
    %2 = vector.shape_cast %1 : vector<1x4x256xf32> to vector<4x256xf32>
    %cst = arith.constant dense<0.000000e+00> : vector<8x256xf32>
    %3 = tpu.matmul %0, %2, %cst {dimension_numbers = #tpu.dot_dimension_numbers<[1], [0], [0], [1], [0, 0, 1, 1], [], []>} : vector<8x4xf32>, vector<4x256xf32>, vector<8x256xf32> -> vector<8x256xf32>
    %c0_4 = arith.constant 0 : index
    %c0_5 = arith.constant 0 : index
    %4 = vector.load %arg5[%c0_4, %c0_5] : memref<8x1xf32, #tpu.memory_space<vmem>>, vector<8x1xf32>
    %5 = vector.broadcast %4 : vector<8x1xf32> to vector<8x256xf32>
    %6 = arith.addf %3, %5 : vector<8x256xf32>
    %7 = math.tanh %6 : vector<8x256xf32>
    %c0_6 = arith.constant 0 : index
    %c0_7 = arith.constant 0 : index
    %c0_8 = arith.constant 0 : index
    %8 = vector.load %arg6[%c0_6, %c0_7, %c0_8] : memref<1x8x256xf32, #tpu.memory_space<vmem>>, vector<1x8x256xf32>
    %9 = vector.shape_cast %8 : vector<1x8x256xf32> to vector<8x256xf32>
    %10 = vector.shape_cast %7 : vector<8x256xf32> to vector<1x8x256xf32>
    tpu.vector_store %arg6[%c0_6, %c0_7, %c0_8], %10 {strides = array<i32>} : memref<1x8x256xf32, #tpu.memory_space<vmem>>, vector<1x8x256xf32>,
    return
  }
  func.func @transform_0(%arg0: i32, %arg1: i32, %arg2: i32) -> (i32, i32, i32) {
    %c0_i32 = arith.constant 0 : i32
    %c0_i32_0 = arith.constant 0 : i32
    return %arg0, %c0_i32, %arg2 : i32, i32, i32
  }
  func.func @transform_1(%arg0: i32, %arg1: i32, %arg2: i32) -> (i32, i32) {
    %c0_i32 = arith.constant 0 : i32
    %c0_i32_0 = arith.constant 0 : i32
    return %arg1, %c0_i32 : i32, i32
  }
  func.func @transform_2(%arg0: i32, %arg1: i32, %arg2: i32) -> (i32, i32) {
    %c0_i32 = arith.constant 0 : i32
    %c0_i32_0 = arith.constant 0 : i32
    return %arg1, %c0_i32 : i32, i32
  }
  func.func @transform_3(%arg0: i32, %arg1: i32, %arg2: i32) -> (i32, i32, i32) {
    %c0_i32 = arith.constant 0 : i32
    return %arg0, %arg1, %arg2 : i32, i32, i32
  }
}

</mosaic_0001>

<llo_original>
// kernel: conv_tanh.1
$region0: #{conv_tanh.1}
  #allocation0 [shape = 'u32[]', space=smem, size = 0x4, offset = 0x4, fixed_abs, tag = 'smem constant byte address 0x4 - core index']
  #allocation1 [shape = 'u32[72,128]{1,0:T(1,128)}', space=vmem, size = 0x9000, scoped, tag = 'internal scratch']
  %s0 = inlined_call_operand.vmem [shape: f32[2,4,256], index: 0, kind: input, shape index: {}]
  %s1 = inlined_call_operand.vmem [shape: f32[8,4], index: 1, kind: input, shape index: {}]
  %s2 = inlined_call_operand.vmem [shape: f32[8,1], index: 2, kind: input, shape index: {}]
  %s3 = inlined_call_operand.vmem [shape: f32[2,8,256], index: 3, kind: output, shape index: {}]
  %s4 = sld [smem:[#allocation0]]
  $region45: #{conv_tanh.1} parent=0
    _
  %s6 = ssub.s32 1, %s4
  %s7 = scalar_select 0, %s6, %s4
  loop: start=0, step=1, limit=4
  $region2: #{conv_tanh.1} parent=0 // loop_pre_header
    _
  $region3: #{conv_tanh.1} parent=0 // loop_header
    %s9 = sphi 0, %s13
    %p10 = scmp.ge.s32.totalorder %s9, 4
    %s16 = sphi 0, %s35
    %s17 = sphi 0, %s31
    %s18 = sphi 0, %s27
    %s19 = sphi 0, %s16
    %s20 = sphi 0, %s17
    %s21 = sphi 0, %s18
    %s22 = sphi 0, %s19
    %s23 = sphi 0, %s20
    %s24 = sphi 0, %s21
    %s40 = sphi 0, %s42
    %s43 = sphi 0, %s40
    %s44 = sphi 0, %s43
    %s60 = sphi 0, %s44
    %s66 = sphi 0, %s68
    %s69 = sphi 0, %s66
    %s70 = sphi 0, %s69
    %s86 = sphi 0, %s70
    %s92 = sphi 0, %s94
    %s95 = sphi 0, %s92
    %s96 = sphi 0, %s95
    %s112 = sphi 0, %s96
    %s122 = sphi 0, %s124
    %s125 = sphi 0, %s122
    %s126 = sphi 0, %s125
    %s142 = sphi 0, %s126
  $region4: #{conv_tanh.1} parent=0 // loop_header_branch
    %12 = sbr.rel (%p10) target = $region8
  $region5: #{conv_tanh.1} parent=0 // loop_body
    %s14 = ssub.s32 %s9, 1
    %s15 = ssub.s32 %s9, 2
    %s25 = sadd.s32 1, %s18
    %p26 = scmp.ge.s32.totalorder %s25, 1
    %s27 = scalar_select %p26, 0, %s25
    %s28 = sadd.s32 1, %s17
    %s29 = scalar_select %p26, %s28, %s17
    %p30 = scmp.ge.s32.totalorder %s29, 1
    %s31 = scalar_select %p30, 0, %s29
    %s32 = sadd.s32 1, %s16
    %s33 = scalar_select %p30, %s32, %s16
    %p34 = scmp.ge.s32.totalorder %s33, 2
    %s35 = scalar_select %p34, 0, %s33
    %s36 = ssub.s32 %s16, %s35
    %s37 = ssub.s32 %s18, %s27
    %s38 = sor.u32 %s36, %s37
    %p39 = scmp.eq.s32.totalorder %s38, 0
    %s41 = sadd.s32 %s40, 1
    %s42 = scalar_select %p39, %s40, %s41
    %p45 = pneg %p39
    %p46 = scmp.eq.s32.totalorder %s9, 1
    %p47 = por %p45, %p46
    %p48 = scmp.ne.s32.totalorder %s40, %s43
    %p49 = scmp.eq.s32.totalorder %s9, 0
    %p50 = por %p48, %p49
    %p51 = scmp.ne.s32.totalorder %s40, %s43
    %p52 = scmp.eq.s32.totalorder %s14, 1
    %p53 = por %p51, %p52
    %p54 = scmp.ne.s32.totalorder %s43, %s44
    %p55 = scmp.eq.s32.totalorder %s14, 0
    %p56 = por %p54, %p55
    %p57 = scmp.ne.s32.totalorder %s43, %s44
    %p58 = scmp.eq.s32.totalorder %s15, 1
    %p59 = por %p57, %p58
    %p61 = scmp.ne.s32.totalorder %s44, %s60
    %p62 = scmp.eq.s32.totalorder %s15, 0
    %p63 = por %p61, %p62
    %s64 = ssub.s32 %s17, %s31
    %p65 = scmp.eq.s32.totalorder %s64, 0
    %s67 = sadd.s32 %s66, 1
    %s68 = scalar_select %p65, %s66, %s67
    %p71 = pneg %p65
    %p72 = scmp.eq.s32.totalorder %s9, 1
    %p73 = por %p71, %p72
    %p74 = scmp.ne.s32.totalorder %s66, %s69
    %p75 = scmp.eq.s32.totalorder %s9, 0
    %p76 = por %p74, %p75
    %p77 = scmp.ne.s32.totalorder %s66, %s69
    %p78 = scmp.eq.s32.totalorder %s14, 1
    %p79 = por %p77, %p78
    %p80 = scmp.ne.s32.totalorder %s69, %s70
    %p81 = scmp.eq.s32.totalorder %s14, 0
    %p82 = por %p80, %p81
    %p83 = scmp.ne.s32.totalorder %s69, %s70
    %p84 = scmp.eq.s32.totalorder %s15, 1
    %p85 = por %p83, %p84
    %p87 = scmp.ne.s32.totalorder %s70, %s86
    %p88 = scmp.eq.s32.totalorder %s15, 0
    %p89 = por %p87, %p88
    %s90 = ssub.s32 %s17, %s31
    %p91 = scmp.eq.s32.totalorder %s90, 0
    %s93 = sadd.s32 %s92, 1
    %s94 = scalar_select %p91, %s92, %s93
    %p97 = pneg %p91
    %p98 = scmp.eq.s32.totalorder %s9, 1
    %p99 = por %p97, %p98
    %p100 = scmp.ne.s32.totalorder %s92, %s95
    %p101 = scmp.eq.s32.totalorder %s9, 0
    %p102 = por %p100, %p101
    %p103 = scmp.ne.s32.totalorder %s92, %s95
    %p104 = scmp.eq.s32.totalorder %s14, 1
    %p105 = por %p103, %p104
    %p106 = scmp.ne.s32.totalorder %s95, %s96
    %p107 = scmp.eq.s32.totalorder %s14, 0
    %p108 = por %p106, %p107
    %p109 = scmp.ne.s32.totalorder %s95, %s96
    %p110 = scmp.eq.s32.totalorder %s15, 1
    %p111 = por %p109, %p110
    %p113 = scmp.ne.s32.totalorder %s96, %s112
    %p114 = scmp.eq.s32.totalorder %s15, 0
    %p115 = por %p113, %p114
    %s116 = ssub.s32 %s16, %s35
    %s117 = ssub.s32 %s17, %s31
    %s118 = sor.u32 %s116, %s117
    %s119 = ssub.s32 %s18, %s27
    %s120 = sor.u32 %s118, %s119
    %p121 = scmp.eq.s32.totalorder %s120, 0
    %s123 = sadd.s32 %s122, 1
    %s124 = scalar_select %p121, %s122, %s123
    %p127 = pneg %p121
    %p128 = scmp.eq.s32.totalorder %s9, 1
    %p129 = por %p127, %p128
    %p130 = scmp.ne.s32.totalorder %s122, %s125
    %p131 = scmp.eq.s32.totalorder %s9, 0
    %p132 = por %p130, %p131
    %p133 = scmp.ne.s32.totalorder %s122, %s125
    %p134 = scmp.eq.s32.totalorder %s14, 1
    %p135 = por %p133, %p134
    %p136 = scmp.ne.s32.totalorder %s125, %s126
    %p137 = scmp.eq.s32.totalorder %s14, 0
    %p138 = por %p136, %p137
    %p139 = scmp.ne.s32.totalorder %s125, %s126
    %p140 = scmp.eq.s32.totalorder %s15, 1
    %p141 = por %p139, %p140
    %p143 = scmp.ne.s32.totalorder %s126, %s142
    %p144 = scmp.eq.s32.totalorder %s15, 0
    %p145 = por %p143, %p144
    %p146 = scmp.le.s32.totalorder 1, %s9
    %p147 = scmp.lt.s32.totalorder %s9, 3
    %p148 = pnand %p146, %p147
    %p149 = pneg %p148
    // Predicated region
    $region9: #{conv_tanh.1} parent=5 // pred_check
      _
    $region10: #{conv_tanh.1} parent=5 // pred_check_branch
      %151 = sbr.rel (%p148) target = $region12
    $region11: #{conv_tanh.1} parent=5 // pred_region
      %s152 = ssub.s32 %s9, 1
      // Predicated region
      $region13: #{conv_tanh.1} parent=11 // pred_check
        %p153 = pneg %p82
      $region14: #{conv_tanh.1} parent=11 // pred_check_branch
        %155 = sbr.rel (%p153) target = $region16
      $region15: #{conv_tanh.1} parent=11 // pred_region
        %p156 = scmp.lt.s32.totalorder %s20, 0
        %s157 = scalar_select %p156, %s20, 0
        %s158 = smul.addr %s157, 8
        %s159 = scalar_lea.vmem %s1, %s158
      $region16: #{conv_tanh.1} parent=11 // pred_fallthru
        _
      // Predicated region
      $region17: #{conv_tanh.1} parent=11 // pred_check
        %p160 = pneg %p108
      $region18: #{conv_tanh.1} parent=11 // pred_check_branch
        %162 = sbr.rel (%p160) target = $region20
      $region19: #{conv_tanh.1} parent=11 // pred_region
        %p163 = scmp.lt.s32.totalorder %s20, 0
        %s164 = scalar_select %p163, %s20, 0
        %s165 = smul.addr %s164, 8
        %s166 = scalar_lea.vmem %s2, %s165
      $region20: #{conv_tanh.1} parent=11 // pred_fallthru
        _
    $region12: #{conv_tanh.1} parent=5 // pred_fallthru
      _
    %p167 = scmp.lt.s32.totalorder %s9, 2
    // Predicated region
    $region21: #{conv_tanh.1} parent=5 // pred_check
      %p168 = pneg %p167
    $region22: #{conv_tanh.1} parent=5 // pred_check_branch
      %170 = sbr.rel (%p168) target = $region24
    $region23: #{conv_tanh.1} parent=5 // pred_region
      // Predicated region
      $region25: #{conv_tanh.1} parent=23 // pred_check
        %p171 = pneg %p50
      $region26: #{conv_tanh.1} parent=23 // pred_check_branch
        %173 = sbr.rel (%p171) target = $region28
      $region27: #{conv_tanh.1} parent=23 // pred_region
        %s174 = smul.u32 2, %s18
        %p175 = scmp.lt.s32.totalorder %s16, 1
        %s176 = scalar_select %p175, %s16, 1
        %p177 = scmp.lt.s32.totalorder %s174, 1
        %s178 = scalar_select %p177, %s174, 1
        %s179 = smul.addr %s176, 2
        %s180 = sadd.s32 %s178, %s179
        %s181 = smul.addr %s180, 4
        %s182 = scalar_lea.vmem %s0, %s181
        %s183 = smul.u32 2, %s18
      $region28: #{conv_tanh.1} parent=23 // pred_fallthru
        _
    $region24: #{conv_tanh.1} parent=5 // pred_fallthru
      _
    %p184 = scmp.le.s32.totalorder 1, %s9
    %p185 = scmp.lt.s32.totalorder %s9, 3
    %p186 = pnand %p184, %p185
    %p187 = pneg %p186
    // Predicated region
    $region29: #{conv_tanh.1} parent=5 // pred_check
      _
    $region30: #{conv_tanh.1} parent=5 // pred_check_branch
      %189 = sbr.rel (%p186) target = $region32
    $region31: #{conv_tanh.1} parent=5 // pred_region
      %s190 = ssub.s32 %s9, 1
      %s191 = smul.u32 2, %s21
      %p192 = scmp.lt.s32.totalorder %s19, 1
      %s193 = scalar_select %p192, %s19, 1
      %p194 = scmp.lt.s32.totalorder %s191, 1
      %s195 = scalar_select %p194, %s191, 1
      %s196 = smul.addr %s193, 2
      %s197 = sadd.s32 %s195, %s196
      %s198 = smul.addr %s197, 4
      %s199 = scalar_lea.vmem %s0, %s198
      %p200 = pneg %p56
      %p201 = pneg %p53
      %p202 = scmp.lt.s32.totalorder %s20, 0
      %s203 = scalar_select %p202, %s20, 0
      %s204 = smul.addr %s203, 8
      %s205 = scalar_lea.vmem %s1, %s204
      %p206 = pneg %p82
      %p207 = pneg %p79
      %p208 = scmp.lt.s32.totalorder %s20, 0
      %s209 = scalar_select %p208, %s20, 0
      %s210 = smul.addr %s209, 8
      %s211 = scalar_lea.vmem %s2, %s210
      %p212 = pneg %p108
      %p213 = pneg %p105
      %p214 = pneg %p138
      %p215 = pneg %p135
      %s216 = smul.u32 2, %s21
      %p217 = scmp.lt.s32.totalorder %s19, 1
      %s218 = scalar_select %p217, %s19, 1
      %p219 = scmp.lt.s32.totalorder %s20, 0
      %s220 = scalar_select %p219, %s20, 0
      %p221 = scmp.lt.s32.totalorder %s216, 1
      %s222 = scalar_select %p221, %s216, 1
      %s223 = smul.addr %s220, 2
      %s224 = sadd.s32 %s222, %s223
      %s225 = smul.addr %s218, 2
      %s226 = sadd.s32 %s224, %s225
      %s227 = smul.addr %s226, 8
      %s228 = scalar_lea.vmem %s3, %s227
      %s229 = smul.u32 2, %s21
      %p230 = scmp.lt.s32.totalorder %s19, 1
      %s231 = scalar_select %p230, %s19, 1
      %p232 = scmp.lt.s32.totalorder %s229, 1
      %s233 = scalar_select %p232, %s229, 1
      %s234 = smul.addr %s231, 2
      %s235 = sadd.s32 %s233, %s234
      %s236 = smul.addr %s235, 4
      %s237 = scalar_lea.vmem %s0, %s236
      %s238 = smul.u32 2, %s21
      %p239 = scmp.lt.s32.totalorder %s20, 0
      %s240 = scalar_select %p239, %s20, 0
      %s241 = smul.addr %s240, 8
      %s242 = scalar_lea.vmem %s1, %s241
      %p243 = scmp.lt.s32.totalorder %s20, 0
      %s244 = scalar_select %p243, %s20, 0
      %s245 = smul.addr %s244, 8
      %s246 = scalar_lea.vmem %s2, %s245
      %s247 = smul.u32 2, %s21
      %p248 = scmp.lt.s32.totalorder %s19, 1
      %s249 = scalar_select %p248, %s19, 1
      %p250 = scmp.lt.s32.totalorder %s20, 0
      %s251 = scalar_select %p250, %s20, 0
      %p252 = scmp.lt.s32.totalorder %s247, 1
      %s253 = scalar_select %p252, %s247, 1
      %s254 = smul.addr %s251, 2
      %s255 = sadd.s32 %s253, %s254
      %s256 = smul.addr %s249, 2
      %s257 = sadd.s32 %s255, %s256
      %s258 = smul.addr %s257, 8
      %s259 = scalar_lea.vmem %s3, %s258
      %s260 = smul.u32 2, %s21
      %v261 = vld [vmem:[%s242] sm:$0xff]
      %v262 = vld [vmem:[%s237] sm:$0xff]
      %v263 = vld [vmem:[%s246] sm:$0xff]
      %265 = vset.pattern.permute.xlu0 0
      %266 = vperm.xlu0 %265, %v263
      %v267 = vpop.permute.xlu0 %266
      %270 = vst [vmem:[#allocation1] ss:$2 sm:$0xff] %v262
      %v271 = vld.sshfl [vmem:[#allocation1] sm:$0xff pattern:$0x75316420]
      %v272 = vld.sshfl [vmem:[#allocation1 + $0x8] sm:$0xff pattern:$0x75316420]
      %vm273 = vcmask 31744
      %v275 = vsel %vm273, %v261, 0
      %vm277 = vcmask 1043456
      %v278 = vsel %vm277, %v271, 0
      %v280 = vsel %vm277, %v272, 0
      %282 = vmatpush.msra.mxu0 0.0
      %283 = vmatpush.msra.mxu0 0.0
      %284 = vmatpush.msra.mxu0 0.0
      %285 = vmatpush.msra.mxu0 0.0
      %286 = vmatpush.msra.mxu0 0.0
      %287 = vmatpush.msra.mxu0 0.0
      %288 = vmatpush.msra.mxu0 0.0
      %289 = vmatpush.msra.mxu0 0.0
      %290 = vmatpush.msra.mxu0 0.0
      %291 = vmatpush.msra.mxu0 0.0
      %292 = vmatpush.msra.mxu0 0.0
      %293 = vmatpush.msra.mxu0 0.0
      %294 = vmatpush.msra.mxu0 0.0
      %295 = vmatpush.msra.mxu0 0.0
      %296 = vmatpush.msra.mxu0 0.0
      %297 = vmatpush.msra.mxu0 %v278
      %298 = vmatmul.f32.gmra.mxu0 %v275
      %v299 = vpop.f32.mrf.mxu0
      %v300 = vadd.f32 %v267, %v299
      %301 = vdwg.mxu0
      %302 = vmatpush.msra.mxu0 0.0
      %303 = vmatpush.msra.mxu0 0.0
      %304 = vmatpush.msra.mxu0 0.0
      %305 = vmatpush.msra.mxu0 0.0
      %306 = vmatpush.msra.mxu0 0.0
      %307 = vmatpush.msra.mxu0 0.0
      %308 = vmatpush.msra.mxu0 0.0
      %309 = vmatpush.msra.mxu0 0.0
      %310 = vmatpush.msra.mxu0 0.0
      %311 = vmatpush.msra.mxu0 0.0
      %312 = vmatpush.msra.mxu0 0.0
      %313 = vmatpush.msra.mxu0 0.0
      %314 = vmatpush.msra.mxu0 0.0
      %315 = vmatpush.msra.mxu0 0.0
      %316 = vmatpush.msra.mxu0 0.0
      %317 = vmatpush.msra.mxu0 %v280
      %318 = vmatmul.f32.gmra.mxu0 %v275
      %v319 = vpop.f32.mrf.mxu0
      %v320 = vadd.f32 %v267, %v319
      %321 = vdwg.mxu0
      %v322 = vtanh.pop %v300
      %v323 = vtanh.pop %v320
      %324 = vst [vmem:[%s259] sm:$0xff] %v322
      %325 = vst [vmem:[%s259 + $0x8] sm:$0xff] %v323
      %s326 = smul.u32 2, %s21
      %p327 = scmp.lt.s32.totalorder %s19, 1
      %s328 = scalar_select %p327, %s19, 1
      %p329 = scmp.lt.s32.totalorder %s20, 0
      %s330 = scalar_select %p329, %s20, 0
      %p331 = scmp.lt.s32.totalorder %s326, 1
      %s332 = scalar_select %p331, %s326, 1
      %s333 = smul.addr %s330, 2
      %s334 = sadd.s32 %s332, %s333
      %s335 = smul.addr %s328, 2
      %s336 = sadd.s32 %s334, %s335
      %s337 = smul.addr %s336, 8
      %s338 = scalar_lea.vmem %s3, %s337
      // Predicated region
      $region33: #{conv_tanh.1} parent=31 // pred_check
        %p339 = pneg %p135
      $region34: #{conv_tanh.1} parent=31 // pred_check_branch
        %341 = sbr.rel (%p339) target = $region36
      $region35: #{conv_tanh.1} parent=31 // pred_region
        %s342 = smul.u32 2, %s21
      $region36: #{conv_tanh.1} parent=31 // pred_fallthru
        _
    $region32: #{conv_tanh.1} parent=5 // pred_fallthru
      _
    %p343 = scmp.le.s32.totalorder 2, %s9
    // Predicated region
    $region37: #{conv_tanh.1} parent=5 // pred_check
      %p344 = pneg %p343
    $region38: #{conv_tanh.1} parent=5 // pred_check_branch
      %346 = sbr.rel (%p344) target = $region40
    $region39: #{conv_tanh.1} parent=5 // pred_region
      %s347 = ssub.s32 %s9, 2
      // Predicated region
      $region41: #{conv_tanh.1} parent=39 // pred_check
        %p348 = pneg %p141
      $region42: #{conv_tanh.1} parent=39 // pred_check_branch
        %350 = sbr.rel (%p348) target = $region44
      $region43: #{conv_tanh.1} parent=39 // pred_region
        %s351 = smul.u32 2, %s24
        %p352 = scmp.lt.s32.totalorder %s22, 1
        %s353 = scalar_select %p352, %s22, 1
        %p354 = scmp.lt.s32.totalorder %s23, 0
        %s355 = scalar_select %p354, %s23, 0
        %p356 = scmp.lt.s32.totalorder %s351, 1
        %s357 = scalar_select %p356, %s351, 1
        %s358 = smul.addr %s355, 2
        %s359 = sadd.s32 %s357, %s358
        %s360 = smul.addr %s353, 2
        %s361 = sadd.s32 %s359, %s360
        %s362 = smul.addr %s361, 8
        %s363 = scalar_lea.vmem %s3, %s362
      $region44: #{conv_tanh.1} parent=39 // pred_fallthru
        _
    $region40: #{conv_tanh.1} parent=5 // pred_fallthru
      _
  $region6: #{conv_tanh.1} parent=0 // loop_footer
    %s13 = sadd.s32 1, %s9
  $region7: #{conv_tanh.1} parent=0 // loop_footer_branch
    %8 = sbr.rel target = $region3
  $region8: #{conv_tanh.1} parent=0 // loop_exit
    _

</llo_original>
